<compile_context>
chip_gen: v7x
topology: tpu7x:2x2x1
jax: 0.10.0
libtpu: 0.0.40
codegen_flags: <defaults>
</compile_context>

<pallas_src>
import jax
import jax.numpy as jnp
from jax.experimental import pallas as pl
from jax.experimental.pallas import tpu as pltpu


def _conv1x1_kernel(w_ref, x_ref, o_ref):
    # Weight-stationary GEMM tile: out(C_out, tn) = W(C_out, C_in) @ X(C_in, tn).
    o_ref[...] = jnp.dot(
        w_ref[...], x_ref[...], preferred_element_type=jnp.float32
    ).astype(o_ref.dtype)


def _pick_tn(m):
    """Lane-dim (spatial) tile size.

    Multiple of 128 (or the full dim for tiny images), sized so a typical
    image splits into ~2 lane tiles, capped at 4096 lanes for VMEM headroom.
    """
    if m <= 128:
        return m
    tn = 128 * pl.cdiv(pl.cdiv(m, 2), 128)
    return min(tn, 4096)


def _conv2d_1x1_impl(x_nchw, weight_oi11):
    """nn.Conv2d(C_in, C_out, kernel_size=1, stride=1, bias=False).

    x_nchw:      (N, C_in, H, W)
    weight_oi11: (C_out, C_in, 1, 1)  -- PyTorch conv weight layout
    returns:     (N, C_out, H, W)
    """
    N, C_in, H, W = x_nchw.shape
    C_out = weight_oi11.shape[0]
    M = H * W

    # Pure views -- no transposes, no padded copies.
    x3d = x_nchw.reshape(N, C_in, M)
    w2d = weight_oi11.reshape(C_out, C_in)

    tn = _pick_tn(M)
    m_tiles = pl.cdiv(M, tn)

    cost = pl.CostEstimate(
        flops=2 * N * M * C_in * C_out,
        transcendentals=0,
        bytes_accessed=(N * M * C_in + C_in * C_out + N * M * C_out)
        * x_nchw.dtype.itemsize,
    )

    out3d = pl.pallas_call(
        _conv1x1_kernel,
        out_shape=jax.ShapeDtypeStruct((N, C_out, M), x_nchw.dtype),
        grid_spec=pltpu.PrefetchScalarGridSpec(
            num_scalar_prefetch=0,
            grid=(N, m_tiles),
            in_specs=[
                # Full (C_out, C_in) weight, resident across all grid steps.
                pl.BlockSpec((C_out, C_in), lambda b, j: (0, 0)),
                # (C_in, tn) lane tile of the current batch image.
                pl.BlockSpec((pl.Squeezed(), C_in, tn), lambda b, j: (b, 0, j)),
            ],
            out_specs=pl.BlockSpec(
                (pl.Squeezed(), C_out, tn), lambda b, j: (b, 0, j)
            ),
        ),
        compiler_params=pltpu.CompilerParams(
            dimension_semantics=("parallel", "parallel"),
        ),
        cost_estimate=cost,
    )(w2d, x3d)

    return out3d.reshape(N, C_out, H, W)


conv2d_1x1 = jax.jit(_conv2d_1x1_impl)


if __name__ == "__main__":
    key = jax.random.PRNGKey(0)
    kx1, kx2, kw = jax.random.split(key, 3)

    # Channel dims fixed by the module (128 -> 256); small batch/spatial.
    weight = jax.random.normal(kw, (256, 128, 1, 1), dtype=jnp.float32) * 0.05

    def ref_conv(x, w):
        return jax.lax.conv_general_dilated(
            x, w, window_strides=(1, 1), padding="VALID",
            dimension_numbers=("NCHW", "OIHW", "NCHW"),
        )

    # Case 1: evenly tiled (2 batches x 2 lane tiles of 128).
    x1 = jax.random.normal(kx1, (2, 128, 16, 16), dtype=jnp.float32)
    out1 = jax.block_until_ready(conv2d_1x1(x1, weight))
    assert out1.shape == (2, 256, 16, 16)
    ref1 = ref_conv(x1, weight)
    assert jnp.allclose(out1, ref1, atol=1e-3, rtol=1e-3), float(
        jnp.max(jnp.abs(out1 - ref1))
    )

    # Case 2: ragged last lane tile (H*W = 360 -> tiles of 256 and 104 valid),
    # the same boundary path the full 56x56 module input (H*W = 3136) hits.
    x2 = jax.random.normal(kx2, (1, 128, 20, 18), dtype=jnp.float32)
    out2 = jax.block_until_ready(conv2d_1x1(x2, weight))
    assert out2.shape == (1, 256, 20, 18)
    ref2 = ref_conv(x2, weight)
    assert jnp.allclose(out2, ref2, atol=1e-3, rtol=1e-3), float(
        jnp.max(jnp.abs(out2 - ref2))
    )

    print("KERNEL_OK")
</pallas_src>

<mosaic_0001>
module attributes {stable_mosaic.version = 11 : i64} {
  func.func @_conv1x1_kernel(%arg0: i32, %arg1: i32, %arg2: memref<256x128xf32, #tpu.memory_space<vmem>>, %arg3: memref<1x128x128xf32, #tpu.memory_space<vmem>>, %arg4: memref<1x256x128xf32, #tpu.memory_space<vmem>>) attributes {dimension_semantics = [#tpu.dimension_semantics<parallel>, #tpu.dimension_semantics<parallel>], iteration_bounds = array<i64: 2, 2>, scalar_prefetch = 0 : i64, scratch_operands = 0 : i64, tpu.core_type = #tpu.core_type<tc>, window_params = [{pipeline_mode = #tpu.pipeline_mode<synchronous>, transform_indices = @transform_0, window_bounds = array<i64: 256, 128>}, {transform_indices = @transform_1, window_bounds = array<i64: 1, 128, 128>}, {transform_indices = @transform_2, window_bounds = array<i64: 1, 256, 128>}]} {
    %c0 = arith.constant 0 : index
    %c0_0 = arith.constant 0 : index
    %0 = vector.load %arg2[%c0, %c0_0] : memref<256x128xf32, #tpu.memory_space<vmem>>, vector<256x128xf32>
    %c0_1 = arith.constant 0 : index
    %c0_2 = arith.constant 0 : index
    %c0_3 = arith.constant 0 : index
    %1 = vector.load %arg3[%c0_1, %c0_2, %c0_3] : memref<1x128x128xf32, #tpu.memory_space<vmem>>, vector<1x128x128xf32>
    %2 = vector.shape_cast %1 : vector<1x128x128xf32> to vector<128x128xf32>
    %cst = arith.constant dense<0.000000e+00> : vector<256x128xf32>
    %3 = tpu.matmul %0, %2, %cst {dimension_numbers = #tpu.dot_dimension_numbers<[1], [0], [0], [1], [0, 0, 1, 1], [], []>} : vector<256x128xf32>, vector<128x128xf32>, vector<256x128xf32> -> vector<256x128xf32>
    %c0_4 = arith.constant 0 : index
    %c0_5 = arith.constant 0 : index
    %c0_6 = arith.constant 0 : index
    %4 = vector.load %arg4[%c0_4, %c0_5, %c0_6] : memref<1x256x128xf32, #tpu.memory_space<vmem>>, vector<1x256x128xf32>
    %5 = vector.shape_cast %4 : vector<1x256x128xf32> to vector<256x128xf32>
    %6 = vector.shape_cast %3 : vector<256x128xf32> to vector<1x256x128xf32>
    tpu.vector_store %arg4[%c0_4, %c0_5, %c0_6], %6 {strides = array<i32>} : memref<1x256x128xf32, #tpu.memory_space<vmem>>, vector<1x256x128xf32>,
    return
  }
  func.func @transform_0(%arg0: i32, %arg1: i32) -> (i32, i32) {
    %c0_i32 = arith.constant 0 : i32
    %c0_i32_0 = arith.constant 0 : i32
    %c0_i32_1 = arith.constant 0 : i32
    return %c0_i32, %c0_i32_0 : i32, i32
  }
  func.func @transform_1(%arg0: i32, %arg1: i32) -> (i32, i32, i32) {
    %c0_i32 = arith.constant 0 : i32
    %c0_i32_0 = arith.constant 0 : i32
    return %arg0, %c0_i32, %arg1 : i32, i32, i32
  }
  func.func @transform_2(%arg0: i32, %arg1: i32) -> (i32, i32, i32) {
    %c0_i32 = arith.constant 0 : i32
    %c0_i32_0 = arith.constant 0 : i32
    return %arg0, %c0_i32, %arg1 : i32, i32, i32
  }
}

</mosaic_0001>

<llo_original>
// kernel: _conv2d_1x1_impl.1
$region0: #{_conv2d_1x1_impl.1}
  #allocation0 [shape = 'u32[]', space=smem, size = 0x4, offset = 0x4, fixed_abs, tag = 'smem constant byte address 0x4 - core index']
  #allocation1 [shape = 'u32[144,128]{1,0:T(1,128)}', space=vmem, size = 0x12000, scoped, tag = 'internal scratch']
  %s0 = inlined_call_operand.vmem [shape: f32[256,128], index: 0, kind: input, shape index: {}]
  %s1 = inlined_call_operand.vmem [shape: f32[2,128,256], index: 1, kind: input, shape index: {}]
  %s2 = inlined_call_operand.vmem [shape: f32[2,256,256], index: 2, kind: output, shape index: {}]
  %s3 = sld [smem:[#allocation0]]
  $region113: #{_conv2d_1x1_impl.1} parent=0
    _
  %s5 = ssub.s32 1, %s3
  %s6 = scalar_select 0, %s5, %s3
  $region1: #{_conv2d_1x1_impl.1} parent=0
    #allocation2 [shape = 'u8[131072]{0}', space=vmem, size = 0x20000, scoped, tag = 'input window, operand 1']
    #allocation3 [shape = 'u8[262144]{0}', space=vmem, size = 0x40000, scoped, tag = 'output window, operand 0']
    loop: start=0, step=1, limit=6
    $region2: #{_conv2d_1x1_impl.1} parent=1 // loop_pre_header
      _
    $region3: #{_conv2d_1x1_impl.1} parent=1 // loop_header
      %s8 = sphi 0, %s12
      %p9 = scmp.ge.s32.totalorder %s8, 6
      %s15 = sphi 0, %s27
      %s16 = sphi 0, %s23
      %s17 = sphi 0, %s15
      %s18 = sphi 0, %s16
      %s19 = sphi 0, %s17
      %s20 = sphi 0, %s18
      %s28 = sphi 0, %s28
      %s30 = sphi 0, %s28
      %s31 = sphi 0, %s30
      %s45 = sphi 0, %s31
      %s53 = sphi 0, %s55
      %s56 = sphi 0, %s53
      %s57 = sphi 0, %s56
      %s73 = sphi 0, %s57
      %s81 = sphi 0, %s83
      %s84 = sphi 0, %s81
      %s85 = sphi 0, %s84
      %s101 = sphi 0, %s85
    $region4: #{_conv2d_1x1_impl.1} parent=1 // loop_header_branch
      %11 = sbr.rel (%p9) target = $region8
    $region5: #{_conv2d_1x1_impl.1} parent=1 // loop_body
      %s13 = ssub.s32 %s8, 1
      %s14 = ssub.s32 %s8, 2
      %s21 = sadd.s32 1, %s16
      %p22 = scmp.ge.s32.totalorder %s21, 2
      %s23 = scalar_select %p22, 0, %s21
      %s24 = sadd.s32 1, %s15
      %s25 = scalar_select %p22, %s24, %s15
      %p26 = scmp.ge.s32.totalorder %s25, 2
      %s27 = scalar_select %p26, 0, %s25
      %s29 = sadd.s32 %s28, 1
      %p32 = scmp.eq.s32.totalorder %s8, 3
      %p33 = scmp.ne.s32.totalorder %s28, %s30
      %p34 = scmp.eq.s32.totalorder %s8, 0
      %p35 = por %p33, %p34
      %p36 = scmp.ne.s32.totalorder %s28, %s30
      %p37 = scmp.eq.s32.totalorder %s13, 3
      %p38 = por %p36, %p37
      %p39 = scmp.ne.s32.totalorder %s30, %s31
      %p40 = scmp.eq.s32.totalorder %s13, 0
      %p41 = por %p39, %p40
      %p42 = scmp.ne.s32.totalorder %s30, %s31
      %p43 = scmp.eq.s32.totalorder %s14, 3
      %p44 = por %p42, %p43
      %p46 = scmp.ne.s32.totalorder %s31, %s45
      %p47 = scmp.eq.s32.totalorder %s14, 0
      %p48 = por %p46, %p47
      %s49 = ssub.s32 %s15, %s27
      %s50 = ssub.s32 %s16, %s23
      %s51 = sor.u32 %s49, %s50
      %p52 = scmp.eq.s32.totalorder %s51, 0
      %s54 = sadd.s32 %s53, 1
      %s55 = scalar_select %p52, %s53, %s54
      %p58 = pneg %p52
      %p59 = scmp.eq.s32.totalorder %s8, 3
      %p60 = por %p58, %p59
      %p61 = scmp.ne.s32.totalorder %s53, %s56
      %p62 = scmp.eq.s32.totalorder %s8, 0
      %p63 = por %p61, %p62
      %p64 = scmp.ne.s32.totalorder %s53, %s56
      %p65 = scmp.eq.s32.totalorder %s13, 3
      %p66 = por %p64, %p65
      %p67 = scmp.ne.s32.totalorder %s56, %s57
      %p68 = scmp.eq.s32.totalorder %s13, 0
      %p69 = por %p67, %p68
      %p70 = scmp.ne.s32.totalorder %s56, %s57
      %p71 = scmp.eq.s32.totalorder %s14, 3
      %p72 = por %p70, %p71
      %p74 = scmp.ne.s32.totalorder %s57, %s73
      %p75 = scmp.eq.s32.totalorder %s14, 0
      %p76 = por %p74, %p75
      %s77 = ssub.s32 %s15, %s27
      %s78 = ssub.s32 %s16, %s23
      %s79 = sor.u32 %s77, %s78
      %p80 = scmp.eq.s32.totalorder %s79, 0
      %s82 = sadd.s32 %s81, 1
      %s83 = scalar_select %p80, %s81, %s82
      %p86 = pneg %p80
      %p87 = scmp.eq.s32.totalorder %s8, 3
      %p88 = por %p86, %p87
      %p89 = scmp.ne.s32.totalorder %s81, %s84
      %p90 = scmp.eq.s32.totalorder %s8, 0
      %p91 = por %p89, %p90
      %p92 = scmp.ne.s32.totalorder %s81, %s84
      %p93 = scmp.eq.s32.totalorder %s13, 3
      %p94 = por %p92, %p93
      %p95 = scmp.ne.s32.totalorder %s84, %s85
      %p96 = scmp.eq.s32.totalorder %s13, 0
      %p97 = por %p95, %p96
      %p98 = scmp.ne.s32.totalorder %s84, %s85
      %p99 = scmp.eq.s32.totalorder %s14, 3
      %p100 = por %p98, %p99
      %p102 = scmp.ne.s32.totalorder %s85, %s101
      %p103 = scmp.eq.s32.totalorder %s14, 0
      %p104 = por %p102, %p103
      %p105 = scmp.le.s32.totalorder 1, %s8
      %p106 = scmp.lt.s32.totalorder %s8, 5
      %p107 = pnand %p105, %p106
      %p108 = pneg %p107
      // Predicated region
      $region9: #{_conv2d_1x1_impl.1} parent=5 // pred_check
        _
      $region10: #{_conv2d_1x1_impl.1} parent=5 // pred_check_branch
        %110 = sbr.rel (%p107) target = $region12
      $region11: #{_conv2d_1x1_impl.1} parent=5 // pred_region
        %s111 = ssub.s32 %s8, 1
        // Predicated region
        $region13: #{_conv2d_1x1_impl.1} parent=11 // pred_check
          %p112 = pneg %p41
        $region14: #{_conv2d_1x1_impl.1} parent=11 // pred_check_branch
          %114 = sbr.rel (%p112) target = $region16
        $region15: #{_conv2d_1x1_impl.1} parent=11 // pred_region
          _
        $region16: #{_conv2d_1x1_impl.1} parent=11 // pred_fallthru
          _
      $region12: #{_conv2d_1x1_impl.1} parent=5 // pred_fallthru
        _
      %p115 = scmp.lt.s32.totalorder %s8, 4
      // Predicated region
      $region17: #{_conv2d_1x1_impl.1} parent=5 // pred_check
        %p116 = pneg %p115
      $region18: #{_conv2d_1x1_impl.1} parent=5 // pred_check_branch
        %118 = sbr.rel (%p116) target = $region20
      $region19: #{_conv2d_1x1_impl.1} parent=5 // pred_region
        // Predicated region
        $region21: #{_conv2d_1x1_impl.1} parent=19 // pred_check
          %p119 = pneg %p63
        $region22: #{_conv2d_1x1_impl.1} parent=19 // pred_check_branch
          %121 = sbr.rel (%p119) target = $region24
        $region23: #{_conv2d_1x1_impl.1} parent=19 // pred_region
          %s122 = sand.u32 %s53, 1
          %s123 = sand.u32 %s53, 1
          %s124 = smul.addr %s123, 128
          %s125 = scalar_lea.vmem [#allocation2], %s124
          %s126 = smul.addr %s15, 32
          %s127 = sadd.s32 %s16, %s126
          %s128 = smul.addr %s127, 8
          %s129 = scalar_lea.vmem %s1, %s128
          // Predicated region
          $region25: #{_conv2d_1x1_impl.1} parent=23 // pred_check
            _
          $region26: #{_conv2d_1x1_impl.1} parent=23 // pred_check_branch
            %131 = sbr.rel (0) target = $region28
          $region27: #{_conv2d_1x1_impl.1} parent=23 // pred_region
            // Predicated region
            $region29: #{_conv2d_1x1_impl.1} parent=27 // pred_check
              _
            $region30: #{_conv2d_1x1_impl.1} parent=27 // pred_check_branch
              %133 = sbr.rel (0) target = $region32
            $region31: #{_conv2d_1x1_impl.1} parent=27 // pred_region
              // Predicated region
              $region44: #{_conv2d_1x1_impl.1} parent=31 // pred_check
                _
              $region45: #{_conv2d_1x1_impl.1} parent=31 // pred_check_branch
                %178 = sbr.rel (0) target = $region47
              $region46: #{_conv2d_1x1_impl.1} parent=31 // pred_region
                loop: start=0, step=1, limit=1
                $region48: #{_conv2d_1x1_impl.1} parent=46 // loop_pre_header
                  _
                $region49: #{_conv2d_1x1_impl.1} parent=46 // loop_header
                  %s180 = sphi 0, %s184
                  %p181 = scmp.ge.s32.totalorder %s180, 1
                  %s185 = sphi %s129, %s129
                  %s186 = sphi %s125, %s125
                $region50: #{_conv2d_1x1_impl.1} parent=46 // loop_header_branch
                  %183 = sbr.rel (%p181) target = $region54
                $region51: #{_conv2d_1x1_impl.1} parent=46 // loop_body
                  %v187 = vld [vmem:[%s185] sm:$0xff]
                  %188 = vst [vmem:[%s186] sm:$0xff] %v187
                  %v189 = vld [vmem:[%s185 + $0x10] sm:$0xff]
                  %190 = vst [vmem:[%s186 + $0x8] sm:$0xff] %v189
                  %v191 = vld [vmem:[%s185 + $0x20] sm:$0xff]
                  %192 = vst [vmem:[%s186 + $0x10] sm:$0xff] %v191
                  %v193 = vld [vmem:[%s185 + $0x30] sm:$0xff]
                  %194 = vst [vmem:[%s186 + $0x18] sm:$0xff] %v193
                  %v195 = vld [vmem:[%s185 + $0x40] sm:$0xff]
                  %196 = vst [vmem:[%s186 + $0x20] sm:$0xff] %v195
                  %v197 = vld [vmem:[%s185 + $0x50] sm:$0xff]
                  %198 = vst [vmem:[%s186 + $0x28] sm:$0xff] %v197
                  %v199 = vld [vmem:[%s185 + $0x60] sm:$0xff]
                  %200 = vst [vmem:[%s186 + $0x30] sm:$0xff] %v199
                  %v201 = vld [vmem:[%s185 + $0x70] sm:$0xff]
                  %202 = vst [vmem:[%s186 + $0x38] sm:$0xff] %v201
                  %v203 = vld [vmem:[%s185 + $0x80] sm:$0xff]
                  %204 = vst [vmem:[%s186 + $0x40] sm:$0xff] %v203
                  %v205 = vld [vmem:[%s185 + $0x90] sm:$0xff]
                  %206 = vst [vmem:[%s186 + $0x48] sm:$0xff] %v205
                  %v207 = vld [vmem:[%s185 + $0xa0] sm:$0xff]
                  %208 = vst [vmem:[%s186 + $0x50] sm:$0xff] %v207
                  %v209 = vld [vmem:[%s185 + $0xb0] sm:$0xff]
                  %210 = vst [vmem:[%s186 + $0x58] sm:$0xff] %v209
                  %v211 = vld [vmem:[%s185 + $0xc0] sm:$0xff]
                  %212 = vst [vmem:[%s186 + $0x60] sm:$0xff] %v211
                  %v213 = vld [vmem:[%s185 + $0xd0] sm:$0xff]
                  %214 = vst [vmem:[%s186 + $0x68] sm:$0xff] %v213
                  %v215 = vld [vmem:[%s185 + $0xe0] sm:$0xff]
                  %216 = vst [vmem:[%s186 + $0x70] sm:$0xff] %v215
                  %v217 = vld [vmem:[%s185 + $0xf0] sm:$0xff]
                  %218 = vst [vmem:[%s186 + $0x78] sm:$0xff] %v217
                $region52: #{_conv2d_1x1_impl.1} parent=46 // loop_footer
                  %s184 = sadd.s32 1, %s180
                $region53: #{_conv2d_1x1_impl.1} parent=46 // loop_footer_branch
                  %179 = sbr.rel target = $region49
                $region54: #{_conv2d_1x1_impl.1} parent=46 // loop_exit
                  _
              $region47: #{_conv2d_1x1_impl.1} parent=31 // pred_fallthru
                _
              // Predicated region
              $region55: #{_conv2d_1x1_impl.1} parent=31 // pred_check
                _
              $region56: #{_conv2d_1x1_impl.1} parent=31 // pred_check_branch
                %220 = sbr.rel target = $region58
              $region57: #{_conv2d_1x1_impl.1} parent=31 // pred_region
                _
              $region58: #{_conv2d_1x1_impl.1} parent=31 // pred_fallthru
                _
            $region32: #{_conv2d_1x1_impl.1} parent=27 // pred_fallthru
              _
            // Predicated region
            $region33: #{_conv2d_1x1_impl.1} parent=27 // pred_check
              _
            $region34: #{_conv2d_1x1_impl.1} parent=27 // pred_check_branch
              %135 = sbr.rel target = $region36
            $region35: #{_conv2d_1x1_impl.1} parent=27 // pred_region
              loop: start=0, step=1, limit=1
              $region37: #{_conv2d_1x1_impl.1} parent=35 // loop_pre_header
                _
              $region38: #{_conv2d_1x1_impl.1} parent=35 // loop_header
                %s138 = sphi 0, %s142
                %p139 = scmp.ge.s32.totalorder %s138, 1
                %s143 = sphi %s129, %s129
                %s144 = sphi %s125, %s125
              $region39: #{_conv2d_1x1_impl.1} parent=35 // loop_header_branch
                %141 = sbr.rel (%p139) target = $region43
              $region40: #{_conv2d_1x1_impl.1} parent=35 // loop_body
                %v145 = vld [vmem:[%s143] sm:$0xff]
                %146 = vst [vmem:[%s144] sm:$0xff] %v145
                %v147 = vld [vmem:[%s143 + $0x10] sm:$0xff]
                %148 = vst [vmem:[%s144 + $0x8] sm:$0xff] %v147
                %v149 = vld [vmem:[%s143 + $0x20] sm:$0xff]
                %150 = vst [vmem:[%s144 + $0x10] sm:$0xff] %v149
                %v151 = vld [vmem:[%s143 + $0x30] sm:$0xff]
                %152 = vst [vmem:[%s144 + $0x18] sm:$0xff] %v151
                %v153 = vld [vmem:[%s143 + $0x40] sm:$0xff]
                %154 = vst [vmem:[%s144 + $0x20] sm:$0xff] %v153
                %v155 = vld [vmem:[%s143 + $0x50] sm:$0xff]
                %156 = vst [vmem:[%s144 + $0x28] sm:$0xff] %v155
                %v157 = vld [vmem:[%s143 + $0x60] sm:$0xff]
                %158 = vst [vmem:[%s144 + $0x30] sm:$0xff] %v157
                %v159 = vld [vmem:[%s143 + $0x70] sm:$0xff]
                %160 = vst [vmem:[%s144 + $0x38] sm:$0xff] %v159
                %v161 = vld [vmem:[%s143 + $0x80] sm:$0xff]
                %162 = vst [vmem:[%s144 + $0x40] sm:$0xff] %v161
                %v163 = vld [vmem:[%s143 + $0x90] sm:$0xff]
                %164 = vst [vmem:[%s144 + $0x48] sm:$0xff] %v163
                %v165 = vld [vmem:[%s143 + $0xa0] sm:$0xff]
                %166 = vst [vmem:[%s144 + $0x50] sm:$0xff] %v165
                %v167 = vld [vmem:[%s143 + $0xb0] sm:$0xff]
                %168 = vst [vmem:[%s144 + $0x58] sm:$0xff] %v167
                %v169 = vld [vmem:[%s143 + $0xc0] sm:$0xff]
                %170 = vst [vmem:[%s144 + $0x60] sm:$0xff] %v169
                %v171 = vld [vmem:[%s143 + $0xd0] sm:$0xff]
                %172 = vst [vmem:[%s144 + $0x68] sm:$0xff] %v171
                %v173 = vld [vmem:[%s143 + $0xe0] sm:$0xff]
                %174 = vst [vmem:[%s144 + $0x70] sm:$0xff] %v173
                %v175 = vld [vmem:[%s143 + $0xf0] sm:$0xff]
                %176 = vst [vmem:[%s144 + $0x78] sm:$0xff] %v175
              $region41: #{_conv2d_1x1_impl.1} parent=35 // loop_footer
                %s142 = sadd.s32 1, %s138
              $region42: #{_conv2d_1x1_impl.1} parent=35 // loop_footer_branch
                %137 = sbr.rel target = $region38
              $region43: #{_conv2d_1x1_impl.1} parent=35 // loop_exit
                _
            $region36: #{_conv2d_1x1_impl.1} parent=27 // pred_fallthru
              _
          $region28: #{_conv2d_1x1_impl.1} parent=23 // pred_fallthru
            _
          %221 = vnop
        $region24: #{_conv2d_1x1_impl.1} parent=19 // pred_fallthru
          _
      $region20: #{_conv2d_1x1_impl.1} parent=5 // pred_fallthru
        _
      %p222 = scmp.le.s32.totalorder 1, %s8
      %p223 = scmp.lt.s32.totalorder %s8, 5
      %p224 = pnand %p222, %p223
      %p225 = pneg %p224
      // Predicated region
      $region59: #{_conv2d_1x1_impl.1} parent=5 // pred_check
        _
      $region60: #{_conv2d_1x1_impl.1} parent=5 // pred_check_branch
        %227 = sbr.rel (%p224) target = $region62
      $region61: #{_conv2d_1x1_impl.1} parent=5 // pred_region
        %s228 = ssub.s32 %s8, 1
        %s229 = sand.u32 %s56, 1
        %s230 = sand.u32 %s56, 1
        %s231 = smul.addr %s230, 128
        %s232 = scalar_lea.vmem [#allocation2], %s231
        // Predicated region
        $region63: #{_conv2d_1x1_impl.1} parent=61 // pred_check
          %p233 = pneg %p69
        $region64: #{_conv2d_1x1_impl.1} parent=61 // pred_check_branch
          %235 = sbr.rel (%p233) target = $region66
        $region65: #{_conv2d_1x1_impl.1} parent=61 // pred_region
          _
        $region66: #{_conv2d_1x1_impl.1} parent=61 // pred_fallthru
          _
        %p236 = pneg %p41
        %p237 = pneg %p38
        %s238 = sand.u32 %s56, 1
        %s239 = sand.u32 %s56, 1
        %s240 = smul.addr %s239, 128
        %s241 = scalar_lea.vmem [#allocation2], %s240
        %p242 = pneg %p69
        %p243 = pneg %p66
        %p244 = pneg %p97
        %p245 = pneg %p94
        %s246 = sand.u32 %s84, 1
        %s247 = sand.u32 %s84, 1
        %s248 = smul.addr %s247, 256
        %s249 = scalar_lea.vmem [#allocation3], %s248
        %v250 = vld [vmem:[%s0] sm:$0xff]
        %v251 = vld [vmem:[%s0 + $0x8] sm:$0xff]
        %v252 = vld [vmem:[%s0 + $0x10] sm:$0xff]
        %v253 = vld [vmem:[%s0 + $0x18] sm:$0xff]
        %v254 = vld [vmem:[%s0 + $0x20] sm:$0xff]
        %v255 = vld [vmem:[%s0 + $0x28] sm:$0xff]
        %v256 = vld [vmem:[%s0 + $0x30] sm:$0xff]
        %v257 = vld [vmem:[%s0 + $0x38] sm:$0xff]
        %v258 = vld [vmem:[%s0 + $0x40] sm:$0xff]
        %v259 = vld [vmem:[%s0 + $0x48] sm:$0xff]
        %v260 = vld [vmem:[%s0 + $0x50] sm:$0xff]
        %v261 = vld [vmem:[%s0 + $0x58] sm:$0xff]
        %v262 = vld [vmem:[%s0 + $0x60] sm:$0xff]
        %v263 = vld [vmem:[%s0 + $0x68] sm:$0xff]
        %v264 = vld [vmem:[%s0 + $0x70] sm:$0xff]
        %v265 = vld [vmem:[%s0 + $0x78] sm:$0xff]
        %v266 = vld [vmem:[%s0 + $0x80] sm:$0xff]
        %v267 = vld [vmem:[%s0 + $0x88] sm:$0xff]
        %v268 = vld [vmem:[%s0 + $0x90] sm:$0xff]
        %v269 = vld [vmem:[%s0 + $0x98] sm:$0xff]
        %v270 = vld [vmem:[%s0 + $0xa0] sm:$0xff]
        %v271 = vld [vmem:[%s0 + $0xa8] sm:$0xff]
        %v272 = vld [vmem:[%s0 + $0xb0] sm:$0xff]
        %v273 = vld [vmem:[%s0 + $0xb8] sm:$0xff]
        %v274 = vld [vmem:[%s0 + $0xc0] sm:$0xff]
        %v275 = vld [vmem:[%s0 + $0xc8] sm:$0xff]
        %v276 = vld [vmem:[%s0 + $0xd0] sm:$0xff]
        %v277 = vld [vmem:[%s0 + $0xd8] sm:$0xff]
        %v278 = vld [vmem:[%s0 + $0xe0] sm:$0xff]
        %v279 = vld [vmem:[%s0 + $0xe8] sm:$0xff]
        %v280 = vld [vmem:[%s0 + $0xf0] sm:$0xff]
        %v281 = vld [vmem:[%s0 + $0xf8] sm:$0xff]
        %v282 = vld [vmem:[%s232] sm:$0xff]
        %v283 = vld [vmem:[%s232 + $0x8] sm:$0xff]
        %v284 = vld [vmem:[%s232 + $0x10] sm:$0xff]
        %v285 = vld [vmem:[%s232 + $0x18] sm:$0xff]
        %v286 = vld [vmem:[%s232 + $0x20] sm:$0xff]
        %v287 = vld [vmem:[%s232 + $0x28] sm:$0xff]
        %v288 = vld [vmem:[%s232 + $0x30] sm:$0xff]
        %v289 = vld [vmem:[%s232 + $0x38] sm:$0xff]
        %v290 = vld [vmem:[%s232 + $0x40] sm:$0xff]
        %v291 = vld [vmem:[%s232 + $0x48] sm:$0xff]
        %v292 = vld [vmem:[%s232 + $0x50] sm:$0xff]
        %v293 = vld [vmem:[%s232 + $0x58] sm:$0xff]
        %v294 = vld [vmem:[%s232 + $0x60] sm:$0xff]
        %v295 = vld [vmem:[%s232 + $0x68] sm:$0xff]
        %v296 = vld [vmem:[%s232 + $0x70] sm:$0xff]
        %v297 = vld [vmem:[%s232 + $0x78] sm:$0xff]
        %298 = vmatprep.subr.mxu0 0.0
        %299 = vmatpush1.msra.mxu0 %v282
        %300 = vmatprep.subr.mxu0 0.0
        %301 = vmatpush1.msra.mxu0 %v283
        %302 = vmatprep.subr.mxu0 0.0
        %303 = vmatpush1.msra.mxu0 %v284
        %304 = vmatprep.subr.mxu0 0.0
        %305 = vmatpush1.msra.mxu0 %v285
        %306 = vmatprep.subr.mxu0 0.0
        %307 = vmatpush1.msra.mxu0 %v286
        %308 = vmatprep.subr.mxu0 0.0
        %309 = vmatpush1.msra.mxu0 %v287
        %310 = vmatprep.subr.mxu0 0.0
        %311 = vmatpush1.msra.mxu0 %v288
        %312 = vmatprep.subr.mxu0 0.0
        %313 = vmatpush1.msra.mxu0 %v289
        %314 = vmatprep.subr.mxu0 0.0
        %315 = vmatpush1.msra.mxu0 %v290
        %316 = vmatprep.subr.mxu0 0.0
        %317 = vmatpush1.msra.mxu0 %v291
        %318 = vmatprep.subr.mxu0 0.0
        %319 = vmatpush1.msra.mxu0 %v292
        %320 = vmatprep.subr.mxu0 0.0
        %321 = vmatpush1.msra.mxu0 %v293
        %322 = vmatprep.subr.mxu0 0.0
        %323 = vmatpush1.msra.mxu0 %v294
        %324 = vmatprep.subr.mxu0 0.0
        %325 = vmatpush1.msra.mxu0 %v295
        %326 = vmatprep.subr.mxu0 0.0
        %327 = vmatpush1.msra.mxu0 %v296
        %328 = vmatprep.subr.mxu0 0.0
        %329 = vmatpush1.msra.mxu0 %v297
        %330 = vmatprep.subr.mxu0 0.0
        %331 = vmatpush1.msra.mxu0 0.0
        %332 = vmatprep.subr.mxu0 0.0
        %333 = vmatpush1.msra.mxu0 0.0
        %334 = vmatprep.subr.mxu0 0.0
        %335 = vmatpush1.msra.mxu0 0.0
        %336 = vmatprep.subr.mxu0 0.0
        %337 = vmatpush1.msra.mxu0 0.0
        %338 = vmatprep.subr.mxu0 0.0
        %339 = vmatpush1.msra.mxu0 0.0
        %340 = vmatprep.subr.mxu0 0.0
        %341 = vmatpush1.msra.mxu0 0.0
        %342 = vmatprep.subr.mxu0 0.0
        %343 = vmatpush1.msra.mxu0 0.0
        %344 = vmatprep.subr.mxu0 0.0
        %345 = vmatpush1.msra.mxu0 0.0
        %346 = vmatprep.subr.mxu0 0.0
        %347 = vmatpush1.msra.mxu0 0.0
        %348 = vmatprep.subr.mxu0 0.0
        %349 = vmatpush1.msra.mxu0 0.0
        %350 = vmatprep.subr.mxu0 0.0
        %351 = vmatpush1.msra.mxu0 0.0
        %352 = vmatprep.subr.mxu0 0.0
        %353 = vmatpush1.msra.mxu0 0.0
        %354 = vmatprep.subr.mxu0 0.0
        %355 = vmatpush1.msra.mxu0 0.0
        %356 = vmatprep.subr.mxu0 0.0
        %357 = vmatpush1.msra.mxu0 0.0
        %358 = vmatprep.subr.mxu0 0.0
        %359 = vmatpush1.msra.mxu0 0.0
        %360 = vmatprep.subr.mxu0 0.0
        %361 = vmatpush1.msra.mxu0 0.0
        %362 = vmatprep.mubr.f32.mxu0 0.0
        %363 = vmatmul.mubr.f32.gmra.mrb[0].mxu0 %v250
        %v364 = vpop.f32.mrb[0].mxu0
        %v365 = vadd.f32 0.0, %v364
        %v366 = vpop.f32.mrb[0].mxu0
        %367 = vmatprep.mubr.f32.mxu0 0.0
        %368 = vmatmul.mubr.f32.gmra.mrb[0].mxu0 %v251
        %v369 = vpop.f32.mrb[0].mxu0
        %v370 = vadd.f32 0.0, %v369
        %v371 = vpop.f32.mrb[0].mxu0
        %372 = vmatprep.mubr.f32.mxu0 0.0
        %373 = vmatmul.mubr.f32.gmra.mrb[0].mxu0 %v252
        %v374 = vpop.f32.mrb[0].mxu0
        %v375 = vadd.f32 0.0, %v374
        %v376 = vpop.f32.mrb[0].mxu0
        %377 = vmatprep.mubr.f32.mxu0 0.0
        %378 = vmatmul.mubr.f32.gmra.mrb[0].mxu0 %v253
        %v379 = vpop.f32.mrb[0].mxu0
        %v380 = vadd.f32 0.0, %v379
        %v381 = vpop.f32.mrb[0].mxu0
        %382 = vmatprep.mubr.f32.mxu0 0.0
        %383 = vmatmul.mubr.f32.gmra.mrb[0].mxu0 %v254
        %v384 = vpop.f32.mrb[0].mxu0
        %v385 = vadd.f32 0.0, %v384
        %v386 = vpop.f32.mrb[0].mxu0
        %387 = vmatprep.mubr.f32.mxu0 0.0
        %388 = vmatmul.mubr.f32.gmra.mrb[0].mxu0 %v255
        %v389 = vpop.f32.mrb[0].mxu0
        %v390 = vadd.f32 0.0, %v389
        %v391 = vpop.f32.mrb[0].mxu0
        %392 = vmatprep.mubr.f32.mxu0 0.0
        %393 = vmatmul.mubr.f32.gmra.mrb[0].mxu0 %v256
        %v394 = vpop.f32.mrb[0].mxu0
        %v395 = vadd.f32 0.0, %v394
        %v396 = vpop.f32.mrb[0].mxu0
        %397 = vmatprep.mubr.f32.mxu0 0.0
        %398 = vmatmul.mubr.f32.gmra.mrb[0].mxu0 %v257
        %v399 = vpop.f32.mrb[0].mxu0
        %v400 = vadd.f32 0.0, %v399
        %v401 = vpop.f32.mrb[0].mxu0
        %402 = vmatprep.mubr.f32.mxu0 0.0
        %403 = vmatmul.mubr.f32.gmra.mrb[0].mxu0 %v258
        %v404 = vpop.f32.mrb[0].mxu0
        %v405 = vadd.f32 0.0, %v404
        %v406 = vpop.f32.mrb[0].mxu0
        %407 = vmatprep.mubr.f32.mxu0 0.0
        %408 = vmatmul.mubr.f32.gmra.mrb[0].mxu0 %v259
        %v409 = vpop.f32.mrb[0].mxu0
        %v410 = vadd.f32 0.0, %v409
        %v411 = vpop.f32.mrb[0].mxu0
        %412 = vmatprep.mubr.f32.mxu0 0.0
        %413 = vmatmul.mubr.f32.gmra.mrb[0].mxu0 %v260
        %v414 = vpop.f32.mrb[0].mxu0
        %v415 = vadd.f32 0.0, %v414
        %v416 = vpop.f32.mrb[0].mxu0
        %417 = vmatprep.mubr.f32.mxu0 0.0
        %418 = vmatmul.mubr.f32.gmra.mrb[0].mxu0 %v261
        %v419 = vpop.f32.mrb[0].mxu0
        %v420 = vadd.f32 0.0, %v419
        %v421 = vpop.f32.mrb[0].mxu0
        %422 = vmatprep.mubr.f32.mxu0 0.0
        %423 = vmatmul.mubr.f32.gmra.mrb[0].mxu0 %v262
        %v424 = vpop.f32.mrb[0].mxu0
        %v425 = vadd.f32 0.0, %v424
        %v426 = vpop.f32.mrb[0].mxu0
        %427 = vmatprep.mubr.f32.mxu0 0.0
        %428 = vmatmul.mubr.f32.gmra.mrb[0].mxu0 %v263
        %v429 = vpop.f32.mrb[0].mxu0
        %v430 = vadd.f32 0.0, %v429
        %v431 = vpop.f32.mrb[0].mxu0
        %432 = vmatprep.mubr.f32.mxu0 0.0
        %433 = vmatmul.mubr.f32.gmra.mrb[0].mxu0 %v264
        %v434 = vpop.f32.mrb[0].mxu0
        %v435 = vadd.f32 0.0, %v434
        %v436 = vpop.f32.mrb[0].mxu0
        %437 = vmatprep.mubr.f32.mxu0 0.0
        %438 = vmatmul.mubr.f32.gmra.mrb[0].mxu0 %v265
        %v439 = vpop.f32.mrb[0].mxu0
        %v440 = vadd.f32 0.0, %v439
        %v441 = vpop.f32.mrb[0].mxu0
        %442 = vmatprep.mubr.f32.mxu0 0.0
        %443 = vmatmul.mubr.f32.gmra.mrb[0].mxu0 %v266
        %v444 = vpop.f32.mrb[0].mxu0
        %v445 = vadd.f32 0.0, %v444
        %v446 = vpop.f32.mrb[0].mxu0
        %447 = vmatprep.mubr.f32.mxu0 0.0
        %448 = vmatmul.mubr.f32.gmra.mrb[0].mxu0 %v267
        %v449 = vpop.f32.mrb[0].mxu0
        %v450 = vadd.f32 0.0, %v449
        %v451 = vpop.f32.mrb[0].mxu0
        %452 = vmatprep.mubr.f32.mxu0 0.0
        %453 = vmatmul.mubr.f32.gmra.mrb[0].mxu0 %v268
        %v454 = vpop.f32.mrb[0].mxu0
        %v455 = vadd.f32 0.0, %v454
        %v456 = vpop.f32.mrb[0].mxu0
        %457 = vmatprep.mubr.f32.mxu0 0.0
        %458 = vmatmul.mubr.f32.gmra.mrb[0].mxu0 %v269
        %v459 = vpop.f32.mrb[0].mxu0
        %v460 = vadd.f32 0.0, %v459
        %v461 = vpop.f32.mrb[0].mxu0
        %462 = vmatprep.mubr.f32.mxu0 0.0
        %463 = vmatmul.mubr.f32.gmra.mrb[0].mxu0 %v270
        %v464 = vpop.f32.mrb[0].mxu0
        %v465 = vadd.f32 0.0, %v464
        %v466 = vpop.f32.mrb[0].mxu0
        %467 = vmatprep.mubr.f32.mxu0 0.0
        %468 = vmatmul.mubr.f32.gmra.mrb[0].mxu0 %v271
        %v469 = vpop.f32.mrb[0].mxu0
        %v470 = vadd.f32 0.0, %v469
        %v471 = vpop.f32.mrb[0].mxu0
        %472 = vmatprep.mubr.f32.mxu0 0.0
        %473 = vmatmul.mubr.f32.gmra.mrb[0].mxu0 %v272
        %v474 = vpop.f32.mrb[0].mxu0
        %v475 = vadd.f32 0.0, %v474
        %v476 = vpop.f32.mrb[0].mxu0
        %477 = vmatprep.mubr.f32.mxu0 0.0
        %478 = vmatmul.mubr.f32.gmra.mrb[0].mxu0 %v273
        %v479 = vpop.f32.mrb[0].mxu0
        %v480 = vadd.f32 0.0, %v479
        %v481 = vpop.f32.mrb[0].mxu0
        %482 = vmatprep.mubr.f32.mxu0 0.0
        %483 = vmatmul.mubr.f32.gmra.mrb[0].mxu0 %v274
        %v484 = vpop.f32.mrb[0].mxu0
        %v485 = vadd.f32 0.0, %v484
        %v486 = vpop.f32.mrb[0].mxu0
        %487 = vmatprep.mubr.f32.mxu0 0.0
        %488 = vmatmul.mubr.f32.gmra.mrb[0].mxu0 %v275
        %v489 = vpop.f32.mrb[0].mxu0
        %v490 = vadd.f32 0.0, %v489
        %v491 = vpop.f32.mrb[0].mxu0
        %492 = vmatprep.mubr.f32.mxu0 0.0
        %493 = vmatmul.mubr.f32.gmra.mrb[0].mxu0 %v276
        %v494 = vpop.f32.mrb[0].mxu0
        %v495 = vadd.f32 0.0, %v494
        %v496 = vpop.f32.mrb[0].mxu0
        %497 = vmatprep.mubr.f32.mxu0 0.0
        %498 = vmatmul.mubr.f32.gmra.mrb[0].mxu0 %v277
        %v499 = vpop.f32.mrb[0].mxu0
        %v500 = vadd.f32 0.0, %v499
        %v501 = vpop.f32.mrb[0].mxu0
        %502 = vmatprep.mubr.f32.mxu0 0.0
        %503 = vmatmul.mubr.f32.gmra.mrb[0].mxu0 %v278
        %v504 = vpop.f32.mrb[0].mxu0
        %v505 = vadd.f32 0.0, %v504
        %v506 = vpop.f32.mrb[0].mxu0
        %507 = vmatprep.mubr.f32.mxu0 0.0
        %508 = vmatmul.mubr.f32.gmra.mrb[0].mxu0 %v279
        %v509 = vpop.f32.mrb[0].mxu0
        %v510 = vadd.f32 0.0, %v509
        %v511 = vpop.f32.mrb[0].mxu0
        %512 = vmatprep.mubr.f32.mxu0 0.0
        %513 = vmatmul.mubr.f32.gmra.mrb[0].mxu0 %v280
        %v514 = vpop.f32.mrb[0].mxu0
        %v515 = vadd.f32 0.0, %v514
        %v516 = vpop.f32.mrb[0].mxu0
        %517 = vmatprep.mubr.f32.mxu0 0.0
        %518 = vmatmul.mubr.f32.gmra.mrb[0].mxu0 %v281
        %v519 = vpop.f32.mrb[0].mxu0
        %v520 = vadd.f32 0.0, %v519
        %v521 = vpop.f32.mrb[0].mxu0
        %522 = vdwg.mxu0
        %523 = vst [vmem:[%s249] sm:$0xff] %v365
        %524 = vst [vmem:[%s249 + $0x8] sm:$0xff] %v370
        %525 = vst [vmem:[%s249 + $0x10] sm:$0xff] %v375
        %526 = vst [vmem:[%s249 + $0x18] sm:$0xff] %v380
        %527 = vst [vmem:[%s249 + $0x20] sm:$0xff] %v385
        %528 = vst [vmem:[%s249 + $0x28] sm:$0xff] %v390
        %529 = vst [vmem:[%s249 + $0x30] sm:$0xff] %v395
        %530 = vst [vmem:[%s249 + $0x38] sm:$0xff] %v400
        %531 = vst [vmem:[%s249 + $0x40] sm:$0xff] %v405
        %532 = vst [vmem:[%s249 + $0x48] sm:$0xff] %v410
        %533 = vst [vmem:[%s249 + $0x50] sm:$0xff] %v415
        %534 = vst [vmem:[%s249 + $0x58] sm:$0xff] %v420
        %535 = vst [vmem:[%s249 + $0x60] sm:$0xff] %v425
        %536 = vst [vmem:[%s249 + $0x68] sm:$0xff] %v430
        %537 = vst [vmem:[%s249 + $0x70] sm:$0xff] %v435
        %538 = vst [vmem:[%s249 + $0x78] sm:$0xff] %v440
        %539 = vst [vmem:[%s249 + $0x80] sm:$0xff] %v445
        %540 = vst [vmem:[%s249 + $0x88] sm:$0xff] %v450
        %541 = vst [vmem:[%s249 + $0x90] sm:$0xff] %v455
        %542 = vst [vmem:[%s249 + $0x98] sm:$0xff] %v460
        %543 = vst [vmem:[%s249 + $0xa0] sm:$0xff] %v465
        %544 = vst [vmem:[%s249 + $0xa8] sm:$0xff] %v470
        %545 = vst [vmem:[%s249 + $0xb0] sm:$0xff] %v475
        %546 = vst [vmem:[%s249 + $0xb8] sm:$0xff] %v480
        %547 = vst [vmem:[%s249 + $0xc0] sm:$0xff] %v485
        %548 = vst [vmem:[%s249 + $0xc8] sm:$0xff] %v490
        %549 = vst [vmem:[%s249 + $0xd0] sm:$0xff] %v495
        %550 = vst [vmem:[%s249 + $0xd8] sm:$0xff] %v500
        %551 = vst [vmem:[%s249 + $0xe0] sm:$0xff] %v505
        %552 = vst [vmem:[%s249 + $0xe8] sm:$0xff] %v510
        %553 = vst [vmem:[%s249 + $0xf0] sm:$0xff] %v515
        %554 = vst [vmem:[%s249 + $0xf8] sm:$0xff] %v520
        %s555 = sand.u32 %s84, 1
        %s556 = sand.u32 %s84, 1
        %s557 = smul.addr %s556, 256
        %s558 = scalar_lea.vmem [#allocation3], %s557
        // Predicated region
        $region67: #{_conv2d_1x1_impl.1} parent=61 // pred_check
          %p559 = pneg %p94
        $region68: #{_conv2d_1x1_impl.1} parent=61 // pred_check_branch
          %561 = sbr.rel (%p559) target = $region70
        $region69: #{_conv2d_1x1_impl.1} parent=61 // pred_region
          %s562 = smul.addr %s17, 64
          %s563 = sadd.s32 %s18, %s562
          %s564 = smul.addr %s563, 8
          %s565 = scalar_lea.vmem %s2, %s564
          // Predicated region
          $region71: #{_conv2d_1x1_impl.1} parent=69 // pred_check
            _
          $region72: #{_conv2d_1x1_impl.1} parent=69 // pred_check_branch
            %567 = sbr.rel (0) target = $region74
          $region73: #{_conv2d_1x1_impl.1} parent=69 // pred_region
            // Predicated region
            $region75: #{_conv2d_1x1_impl.1} parent=73 // pred_check
              _
            $region76: #{_conv2d_1x1_impl.1} parent=73 // pred_check_branch
              %569 = sbr.rel (0) target = $region78
            $region77: #{_conv2d_1x1_impl.1} parent=73 // pred_region
              // Predicated region
              $region90: #{_conv2d_1x1_impl.1} parent=77 // pred_check
                _
              $region91: #{_conv2d_1x1_impl.1} parent=77 // pred_check_branch
                %646 = sbr.rel (0) target = $region93
              $region92: #{_conv2d_1x1_impl.1} parent=77 // pred_region
                loop: start=0, step=1, limit=1
                $region94: #{_conv2d_1x1_impl.1} parent=92 // loop_pre_header
                  _
                $region95: #{_conv2d_1x1_impl.1} parent=92 // loop_header
                  %s648 = sphi 0, %s652
                  %p649 = scmp.ge.s32.totalorder %s648, 1
                  %s653 = sphi %s558, %s558
                  %s654 = sphi %s565, %s565
                $region96: #{_conv2d_1x1_impl.1} parent=92 // loop_header_branch
                  %651 = sbr.rel (%p649) target = $region100
                $region97: #{_conv2d_1x1_impl.1} parent=92 // loop_body
                  %v655 = vld [vmem:[%s653] sm:$0xff]
                  %656 = vst [vmem:[%s654] sm:$0xff] %v655
                  %v657 = vld [vmem:[%s653 + $0x8] sm:$0xff]
                  %658 = vst [vmem:[%s654 + $0x10] sm:$0xff] %v657
                  %v659 = vld [vmem:[%s653 + $0x10] sm:$0xff]
                  %660 = vst [vmem:[%s654 + $0x20] sm:$0xff] %v659
                  %v661 = vld [vmem:[%s653 + $0x18] sm:$0xff]
                  %662 = vst [vmem:[%s654 + $0x30] sm:$0xff] %v661
                  %v663 = vld [vmem:[%s653 + $0x20] sm:$0xff]
                  %664 = vst [vmem:[%s654 + $0x40] sm:$0xff] %v663
                  %v665 = vld [vmem:[%s653 + $0x28] sm:$0xff]
                  %666 = vst [vmem:[%s654 + $0x50] sm:$0xff] %v665
                  %v667 = vld [vmem:[%s653 + $0x30] sm:$0xff]
                  %668 = vst [vmem:[%s654 + $0x60] sm:$0xff] %v667
                  %v669 = vld [vmem:[%s653 + $0x38] sm:$0xff]
                  %670 = vst [vmem:[%s654 + $0x70] sm:$0xff] %v669
                  %v671 = vld [vmem:[%s653 + $0x40] sm:$0xff]
                  %672 = vst [vmem:[%s654 + $0x80] sm:$0xff] %v671
                  %v673 = vld [vmem:[%s653 + $0x48] sm:$0xff]
                  %674 = vst [vmem:[%s654 + $0x90] sm:$0xff] %v673
                  %v675 = vld [vmem:[%s653 + $0x50] sm:$0xff]
                  %676 = vst [vmem:[%s654 + $0xa0] sm:$0xff] %v675
                  %v677 = vld [vmem:[%s653 + $0x58] sm:$0xff]
                  %678 = vst [vmem:[%s654 + $0xb0] sm:$0xff] %v677
                  %v679 = vld [vmem:[%s653 + $0x60] sm:$0xff]
                  %680 = vst [vmem:[%s654 + $0xc0] sm:$0xff] %v679
                  %v681 = vld [vmem:[%s653 + $0x68] sm:$0xff]
                  %682 = vst [vmem:[%s654 + $0xd0] sm:$0xff] %v681
                  %v683 = vld [vmem:[%s653 + $0x70] sm:$0xff]
                  %684 = vst [vmem:[%s654 + $0xe0] sm:$0xff] %v683
                  %v685 = vld [vmem:[%s653 + $0x78] sm:$0xff]
                  %686 = vst [vmem:[%s654 + $0xf0] sm:$0xff] %v685
                  %v687 = vld [vmem:[%s653 + $0x80] sm:$0xff]
                  %688 = vst [vmem:[%s654 + $0x100] sm:$0xff] %v687
                  %v689 = vld [vmem:[%s653 + $0x88] sm:$0xff]
                  %690 = vst [vmem:[%s654 + $0x110] sm:$0xff] %v689
                  %v691 = vld [vmem:[%s653 + $0x90] sm:$0xff]
                  %692 = vst [vmem:[%s654 + $0x120] sm:$0xff] %v691
                  %v693 = vld [vmem:[%s653 + $0x98] sm:$0xff]
                  %694 = vst [vmem:[%s654 + $0x130] sm:$0xff] %v693
                  %v695 = vld [vmem:[%s653 + $0xa0] sm:$0xff]
                  %696 = vst [vmem:[%s654 + $0x140] sm:$0xff] %v695
                  %v697 = vld [vmem:[%s653 + $0xa8] sm:$0xff]
                  %698 = vst [vmem:[%s654 + $0x150] sm:$0xff] %v697
                  %v699 = vld [vmem:[%s653 + $0xb0] sm:$0xff]
                  %700 = vst [vmem:[%s654 + $0x160] sm:$0xff] %v699
                  %v701 = vld [vmem:[%s653 + $0xb8] sm:$0xff]
                  %702 = vst [vmem:[%s654 + $0x170] sm:$0xff] %v701
                  %v703 = vld [vmem:[%s653 + $0xc0] sm:$0xff]
                  %704 = vst [vmem:[%s654 + $0x180] sm:$0xff] %v703
                  %v705 = vld [vmem:[%s653 + $0xc8] sm:$0xff]
                  %706 = vst [vmem:[%s654 + $0x190] sm:$0xff] %v705
                  %v707 = vld [vmem:[%s653 + $0xd0] sm:$0xff]
                  %708 = vst [vmem:[%s654 + $0x1a0] sm:$0xff] %v707
                  %v709 = vld [vmem:[%s653 + $0xd8] sm:$0xff]
                  %710 = vst [vmem:[%s654 + $0x1b0] sm:$0xff] %v709
                  %v711 = vld [vmem:[%s653 + $0xe0] sm:$0xff]
                  %712 = vst [vmem:[%s654 + $0x1c0] sm:$0xff] %v711
                  %v713 = vld [vmem:[%s653 + $0xe8] sm:$0xff]
                  %714 = vst [vmem:[%s654 + $0x1d0] sm:$0xff] %v713
                  %v715 = vld [vmem:[%s653 + $0xf0] sm:$0xff]
                  %716 = vst [vmem:[%s654 + $0x1e0] sm:$0xff] %v715
                  %v717 = vld [vmem:[%s653 + $0xf8] sm:$0xff]
                  %718 = vst [vmem:[%s654 + $0x1f0] sm:$0xff] %v717
                $region98: #{_conv2d_1x1_impl.1} parent=92 // loop_footer
                  %s652 = sadd.s32 1, %s648
                $region99: #{_conv2d_1x1_impl.1} parent=92 // loop_footer_branch
                  %647 = sbr.rel target = $region95
                $region100: #{_conv2d_1x1_impl.1} parent=92 // loop_exit
                  _
              $region93: #{_conv2d_1x1_impl.1} parent=77 // pred_fallthru
                _
              // Predicated region
              $region101: #{_conv2d_1x1_impl.1} parent=77 // pred_check
                _
              $region102: #{_conv2d_1x1_impl.1} parent=77 // pred_check_branch
                %720 = sbr.rel target = $region104
              $region103: #{_conv2d_1x1_impl.1} parent=77 // pred_region
                _
              $region104: #{_conv2d_1x1_impl.1} parent=77 // pred_fallthru
                _
            $region78: #{_conv2d_1x1_impl.1} parent=73 // pred_fallthru
              _
            // Predicated region
            $region79: #{_conv2d_1x1_impl.1} parent=73 // pred_check
              _
            $region80: #{_conv2d_1x1_impl.1} parent=73 // pred_check_branch
              %571 = sbr.rel target = $region82
            $region81: #{_conv2d_1x1_impl.1} parent=73 // pred_region
              loop: start=0, step=1, limit=1
              $region83: #{_conv2d_1x1_impl.1} parent=81 // loop_pre_header
                _
              $region84: #{_conv2d_1x1_impl.1} parent=81 // loop_header
                %s574 = sphi 0, %s578
                %p575 = scmp.ge.s32.totalorder %s574, 1
                %s579 = sphi %s558, %s558
                %s580 = sphi %s565, %s565
              $region85: #{_conv2d_1x1_impl.1} parent=81 // loop_header_branch
                %577 = sbr.rel (%p575) target = $region89
              $region86: #{_conv2d_1x1_impl.1} parent=81 // loop_body
                %v581 = vld [vmem:[%s579] sm:$0xff]
                %582 = vst [vmem:[%s580] sm:$0xff] %v581
                %v583 = vld [vmem:[%s579 + $0x8] sm:$0xff]
                %584 = vst [vmem:[%s580 + $0x10] sm:$0xff] %v583
                %v585 = vld [vmem:[%s579 + $0x10] sm:$0xff]
                %586 = vst [vmem:[%s580 + $0x20] sm:$0xff] %v585
                %v587 = vld [vmem:[%s579 + $0x18] sm:$0xff]
                %588 = vst [vmem:[%s580 + $0x30] sm:$0xff] %v587
                %v589 = vld [vmem:[%s579 + $0x20] sm:$0xff]
                %590 = vst [vmem:[%s580 + $0x40] sm:$0xff] %v589
                %v591 = vld [vmem:[%s579 + $0x28] sm:$0xff]
                %592 = vst [vmem:[%s580 + $0x50] sm:$0xff] %v591
                %v593 = vld [vmem:[%s579 + $0x30] sm:$0xff]
                %594 = vst [vmem:[%s580 + $0x60] sm:$0xff] %v593
                %v595 = vld [vmem:[%s579 + $0x38] sm:$0xff]
                %596 = vst [vmem:[%s580 + $0x70] sm:$0xff] %v595
                %v597 = vld [vmem:[%s579 + $0x40] sm:$0xff]
                %598 = vst [vmem:[%s580 + $0x80] sm:$0xff] %v597
                %v599 = vld [vmem:[%s579 + $0x48] sm:$0xff]
                %600 = vst [vmem:[%s580 + $0x90] sm:$0xff] %v599
                %v601 = vld [vmem:[%s579 + $0x50] sm:$0xff]
                %602 = vst [vmem:[%s580 + $0xa0] sm:$0xff] %v601
                %v603 = vld [vmem:[%s579 + $0x58] sm:$0xff]
                %604 = vst [vmem:[%s580 + $0xb0] sm:$0xff] %v603
                %v605 = vld [vmem:[%s579 + $0x60] sm:$0xff]
                %606 = vst [vmem:[%s580 + $0xc0] sm:$0xff] %v605
                %v607 = vld [vmem:[%s579 + $0x68] sm:$0xff]
                %608 = vst [vmem:[%s580 + $0xd0] sm:$0xff] %v607
                %v609 = vld [vmem:[%s579 + $0x70] sm:$0xff]
                %610 = vst [vmem:[%s580 + $0xe0] sm:$0xff] %v609
                %v611 = vld [vmem:[%s579 + $0x78] sm:$0xff]
                %612 = vst [vmem:[%s580 + $0xf0] sm:$0xff] %v611
                %v613 = vld [vmem:[%s579 + $0x80] sm:$0xff]
                %614 = vst [vmem:[%s580 + $0x100] sm:$0xff] %v613
                %v615 = vld [vmem:[%s579 + $0x88] sm:$0xff]
                %616 = vst [vmem:[%s580 + $0x110] sm:$0xff] %v615
                %v617 = vld [vmem:[%s579 + $0x90] sm:$0xff]
                %618 = vst [vmem:[%s580 + $0x120] sm:$0xff] %v617
                %v619 = vld [vmem:[%s579 + $0x98] sm:$0xff]
                %620 = vst [vmem:[%s580 + $0x130] sm:$0xff] %v619
                %v621 = vld [vmem:[%s579 + $0xa0] sm:$0xff]
                %622 = vst [vmem:[%s580 + $0x140] sm:$0xff] %v621
                %v623 = vld [vmem:[%s579 + $0xa8] sm:$0xff]
                %624 = vst [vmem:[%s580 + $0x150] sm:$0xff] %v623
                %v625 = vld [vmem:[%s579 + $0xb0] sm:$0xff]
                %626 = vst [vmem:[%s580 + $0x160] sm:$0xff] %v625
                %v627 = vld [vmem:[%s579 + $0xb8] sm:$0xff]
                %628 = vst [vmem:[%s580 + $0x170] sm:$0xff] %v627
                %v629 = vld [vmem:[%s579 + $0xc0] sm:$0xff]
                %630 = vst [vmem:[%s580 + $0x180] sm:$0xff] %v629
                %v631 = vld [vmem:[%s579 + $0xc8] sm:$0xff]
                %632 = vst [vmem:[%s580 + $0x190] sm:$0xff] %v631
                %v633 = vld [vmem:[%s579 + $0xd0] sm:$0xff]
                %634 = vst [vmem:[%s580 + $0x1a0] sm:$0xff] %v633
                %v635 = vld [vmem:[%s579 + $0xd8] sm:$0xff]
                %636 = vst [vmem:[%s580 + $0x1b0] sm:$0xff] %v635
                %v637 = vld [vmem:[%s579 + $0xe0] sm:$0xff]
                %638 = vst [vmem:[%s580 + $0x1c0] sm:$0xff] %v637
                %v639 = vld [vmem:[%s579 + $0xe8] sm:$0xff]
                %640 = vst [vmem:[%s580 + $0x1d0] sm:$0xff] %v639
                %v641 = vld [vmem:[%s579 + $0xf0] sm:$0xff]
                %642 = vst [vmem:[%s580 + $0x1e0] sm:$0xff] %v641
                %v643 = vld [vmem:[%s579 + $0xf8] sm:$0xff]
                %644 = vst [vmem:[%s580 + $0x1f0] sm:$0xff] %v643
              $region87: #{_conv2d_1x1_impl.1} parent=81 // loop_footer
                %s578 = sadd.s32 1, %s574
              $region88: #{_conv2d_1x1_impl.1} parent=81 // loop_footer_branch
                %573 = sbr.rel target = $region84
              $region89: #{_conv2d_1x1_impl.1} parent=81 // loop_exit
                _
            $region82: #{_conv2d_1x1_impl.1} parent=73 // pred_fallthru
              _
          $region74: #{_conv2d_1x1_impl.1} parent=69 // pred_fallthru
            _
          %721 = vnop
        $region70: #{_conv2d_1x1_impl.1} parent=61 // pred_fallthru
          _
      $region62: #{_conv2d_1x1_impl.1} parent=5 // pred_fallthru
        _
      %p722 = scmp.le.s32.totalorder 2, %s8
      // Predicated region
      $region105: #{_conv2d_1x1_impl.1} parent=5 // pred_check
        %p723 = pneg %p722
      $region106: #{_conv2d_1x1_impl.1} parent=5 // pred_check_branch
        %725 = sbr.rel (%p723) target = $region108
      $region107: #{_conv2d_1x1_impl.1} parent=5 // pred_region
        %s726 = ssub.s32 %s8, 2
        // Predicated region
        $region109: #{_conv2d_1x1_impl.1} parent=107 // pred_check
          %p727 = pneg %p100
        $region110: #{_conv2d_1x1_impl.1} parent=107 // pred_check_branch
          %729 = sbr.rel (%p727) target = $region112
        $region111: #{_conv2d_1x1_impl.1} parent=107 // pred_region
          %s730 = sand.u32 %s85, 1
          %s731 = sand.u32 %s85, 1
          %s732 = smul.addr %s731, 256
          %s733 = scalar_lea.vmem [#allocation3], %s732
        $region112: #{_conv2d_1x1_impl.1} parent=107 // pred_fallthru
          _
      $region108: #{_conv2d_1x1_impl.1} parent=5 // pred_fallthru
        _
    $region6: #{_conv2d_1x1_impl.1} parent=1 // loop_footer
      %s12 = sadd.s32 1, %s8
    $region7: #{_conv2d_1x1_impl.1} parent=1 // loop_footer_branch
      %7 = sbr.rel target = $region3
    $region8: #{_conv2d_1x1_impl.1} parent=1 // loop_exit
      _

</llo_original>
